<compile_context>
chip_gen: v5e
topology: v5e:2x2
jax: 0.10.0
libtpu: 0.0.40
codegen_flags: <defaults>
</compile_context>

<pallas_src>
import math

import jax
import jax.numpy as jnp
from jax import lax
from jax.experimental import pallas as pl
from jax.experimental.pallas import tpu as pltpu

_HI = jax.lax.Precision.HIGHEST  # keep XLA-side f32 GEMMs exact for the check


def _round_up(x, m):
    return (x + m - 1) // m * m


def _lstm_recurrence_kernel(gx_ref, whh_ref, h_out_ref, h_sc, c_sc):
    """Serial LSTM recurrence over one chunk of timesteps.

    gx_ref    : (T_CHUNK, Bb, 4*Hp) precomputed x-side gate pre-activations
                (= relu(x W_in^T + b_in) W_ih^T + b_ih + b_hh), zero-padded
                per gate block.
    whh_ref   : (Hp, 4*Hp)  recurrent weight, already transposed + padded.
    h_out_ref : (T_CHUNK, Bb, Hp) hidden states for every timestep (lane-dense).
    h_sc/c_sc : (Bb, Hp) f32 VMEM scratch carrying the recurrence across the
                "arbitrary" time-chunk grid axis.
    """
    # Re-initialize the carried state at the first time-chunk of each batch block.
    @pl.when(pl.program_id(1) == 0)
    def _():
        h_sc[...] = jnp.zeros_like(h_sc)
        c_sc[...] = jnp.zeros_like(c_sc)

    hp = h_sc.shape[-1]
    t_chunk = gx_ref.shape[0]
    w_hh = whh_ref[...]  # resident in VMEM, no in-kernel transpose

    def step(s, carry):
        h, c = carry
        # Single MXU matmul per step; f32 accumulation.
        gates = gx_ref[s] + jnp.dot(
            h.astype(w_hh.dtype), w_hh, preferred_element_type=jnp.float32
        )  # (Bb, 4*Hp), cuDNN gate order i, f, g, o
        i_g = jax.nn.sigmoid(gates[:, 0 * hp:1 * hp])
        f_g = jax.nn.sigmoid(gates[:, 1 * hp:2 * hp])
        g_g = jnp.tanh(gates[:, 2 * hp:3 * hp])
        o_g = jax.nn.sigmoid(gates[:, 3 * hp:4 * hp])
        c_new = f_g * c + i_g * g_g
        h_new = o_g * jnp.tanh(c_new)
        h_out_ref[s] = h_new.astype(h_out_ref.dtype)
        return h_new, c_new

    h, c = lax.fori_loop(
        0, t_chunk, step, (h_sc[...], c_sc[...]), unroll=True
    )
    h_sc[...] = h
    c_sc[...] = c


def cudnn_lstm_model_forward(x, params, *, t_chunk=16, mxu_dtype=jnp.float32):
    """Forward pass of CudnnLstmModel.  x: (T, B, nx) f32 -> (T, B, ny) f32."""
    T, B, nx = x.shape
    H = params["w_hh"].shape[1]
    ny = params["w_out"].shape[0]

    # ---------------- hoisted, fully parallel GEMMs (run in XLA) -------------
    # linearIn + ReLU over the whole sequence.
    x0 = jax.nn.relu(
        jnp.einsum("tbn,hn->tbh", x, params["w_in"], precision=_HI)
        + params["b_in"]
    )  # (T, B, H)
    # x-half of the gate projection + folded biases.
    gates_x = (
        jnp.einsum("tbh,gh->tbg", x0, params["w_ih"], precision=_HI)
        + (params["b_ih"] + params["b_hh"])
    )  # (T, B, 4H)

    # ---------------- pad to hardware-friendly tiles --------------------------
    Hp = _round_up(H, 128)              # lane-dense hidden size
    Bb = min(_round_up(B, 8), 128)      # batch block (sublane multiple)
    Bp = _round_up(B, Bb)
    t_chunk = max(1, min(t_chunk, _round_up(T, 1)))
    Tp = _round_up(T, t_chunk)

    # Pad per gate block: (T, B, 4H) -> (Tp, Bp, 4, Hp) -> (Tp, Bp, 4*Hp).
    # Zero padding keeps padded hidden units exactly at h = c = 0 forever.
    gx = gates_x.reshape(T, B, 4, H)
    gx = jnp.pad(gx, ((0, Tp - T), (0, Bp - B), (0, 0), (0, Hp - H)))
    gx = gx.reshape(Tp, Bp, 4 * Hp)

    # Pre-transpose + pad the recurrent weight: (4H, H) -> (Hp, 4*Hp).
    whh_t = params["w_hh"].T.reshape(H, 4, H)
    whh_t = jnp.pad(whh_t, ((0, Hp - H), (0, 0), (0, Hp - H)))
    whh_t = whh_t.reshape(Hp, 4 * Hp).astype(mxu_dtype)

    n_b = Bp // Bb
    n_t = Tp // t_chunk

    # ---------------- Pallas recurrence kernel --------------------------------
    # Grid: (batch blocks [parallel -> megacore split], time chunks [arbitrary]).
    # Note: for very large H on v7x, add pipeline_mode=pl.Buffered(1) on the
    # (constant-index) weight spec to avoid double-buffering the resident weight.
    h_seq = pl.pallas_call(
        _lstm_recurrence_kernel,
        out_shape=jax.ShapeDtypeStruct((Tp, Bp, Hp), jnp.float32),
        grid_spec=pltpu.PrefetchScalarGridSpec(
            num_scalar_prefetch=0,
            grid=(n_b, n_t),
            in_specs=[
                pl.BlockSpec((t_chunk, Bb, 4 * Hp), lambda b, t: (t, b, 0)),
                pl.BlockSpec((Hp, 4 * Hp), lambda b, t: (0, 0)),
            ],
            out_specs=pl.BlockSpec((t_chunk, Bb, Hp), lambda b, t: (t, b, 0)),
            scratch_shapes=[
                pltpu.VMEM((Bb, Hp), jnp.float32),  # h state
                pltpu.VMEM((Bb, Hp), jnp.float32),  # c state
            ],
        ),
        compiler_params=pltpu.CompilerParams(
            dimension_semantics=("parallel", "arbitrary"),
        ),
    )(gx, whh_t)

    # ---------------- hoisted linearOut (run in XLA; ny is lane-sparse) ------
    h_seq = h_seq[:T, :B, :H]
    out = (
        jnp.einsum("tbh,yh->tby", h_seq, params["w_out"], precision=_HI)
        + params["b_out"]
    )
    return out


def _reference_forward(x, params):
    """Pure-JAX reference of the same forward pass (for sanity checking)."""
    H = params["w_hh"].shape[1]
    B = x.shape[1]
    x0 = jax.nn.relu(
        jnp.einsum("tbn,hn->tbh", x, params["w_in"], precision=_HI)
        + params["b_in"]
    )

    def step(carry, xt):
        h, c = carry
        gates = (
            jnp.dot(xt, params["w_ih"].T, precision=_HI) + params["b_ih"]
            + jnp.dot(h, params["w_hh"].T, precision=_HI) + params["b_hh"]
        )
        i = jax.nn.sigmoid(gates[:, 0 * H:1 * H])
        f = jax.nn.sigmoid(gates[:, 1 * H:2 * H])
        g = jnp.tanh(gates[:, 2 * H:3 * H])
        o = jax.nn.sigmoid(gates[:, 3 * H:4 * H])
        c_new = f * c + i * g
        h_new = o * jnp.tanh(c_new)
        return (h_new, c_new), h_new

    init = (jnp.zeros((B, H), jnp.float32), jnp.zeros((B, H), jnp.float32))
    _, hs = lax.scan(step, init, x0)
    return (
        jnp.einsum("tbh,yh->tby", hs, params["w_out"], precision=_HI)
        + params["b_out"]
    )


def init_params(key, nx, ny, hidden):
    """Deterministic parameter init mirroring the module's shapes.
    Linear layers: PyTorch default U(-1/sqrt(fan_in), 1/sqrt(fan_in));
    LSTM weights: U(-1/sqrt(hidden), 1/sqrt(hidden)) per reset_parameters()."""
    ks = jax.random.split(key, 8)
    u = lambda k, shape, bound: jax.random.uniform(
        k, shape, jnp.float32, minval=-bound, maxval=bound)
    s_in = 1.0 / math.sqrt(nx)
    s_h = 1.0 / math.sqrt(hidden)
    return {
        "w_in": u(ks[0], (hidden, nx), s_in),
        "b_in": u(ks[1], (hidden,), s_in),
        "w_ih": u(ks[2], (4 * hidden, hidden), s_h),
        "w_hh": u(ks[3], (4 * hidden, hidden), s_h),
        "b_ih": u(ks[4], (4 * hidden,), s_h),
        "b_hh": u(ks[5], (4 * hidden,), s_h),
        "w_out": u(ks[6], (ny, hidden), s_h),
        "b_out": u(ks[7], (ny,), s_h),
    }


if __name__ == "__main__":
    T, B, NX, NY, HIDDEN = 8, 2, 4, 3, 32

    key = jax.random.PRNGKey(0)
    k_x, k_p = jax.random.split(key)
    x = jax.random.normal(k_x, (T, B, NX), dtype=jnp.float32)
    params = init_params(k_p, NX, NY, HIDDEN)

    # t_chunk=4 so the demo exercises the h/c carry across grid steps (T=8 -> 2 chunks).
    out = cudnn_lstm_model_forward(x, params, t_chunk=4)
    out = jax.block_until_ready(out)

    ref = jax.block_until_ready(_reference_forward(x, params))
    assert out.shape == (T, B, NY)
    err = float(jnp.max(jnp.abs(out - ref)))
    assert jnp.allclose(out, ref, atol=1e-5, rtol=1e-4), (
        f"mismatch vs JAX reference, max abs err {err:.3e}")

    print("KERNEL_OK")
</pallas_src>

<mosaic_0001>
module attributes {stable_mosaic.version = 11 : i64} {
  func.func @_lstm_recurrence_kernel(%arg0: i32, %arg1: i32, %arg2: memref<4x8x512xf32, #tpu.memory_space<vmem>>, %arg3: memref<128x512xf32, #tpu.memory_space<vmem>>, %arg4: memref<4x8x128xf32, #tpu.memory_space<vmem>>, %arg5: memref<8x128xf32, #tpu.memory_space<vmem>>, %arg6: memref<8x128xf32, #tpu.memory_space<vmem>>) attributes {dimension_semantics = [#tpu.dimension_semantics<parallel>, #tpu.dimension_semantics<arbitrary>], iteration_bounds = array<i64: 1, 2>, scalar_prefetch = 0 : i64, scratch_operands = 2 : i64, tpu.core_type = #tpu.core_type<tc>, window_params = [{transform_indices = @transform_0, window_bounds = array<i64: 4, 8, 512>}, {pipeline_mode = #tpu.pipeline_mode<synchronous>, transform_indices = @transform_1, window_bounds = array<i64: 128, 512>}, {transform_indices = @transform_2, window_bounds = array<i64: 4, 8, 128>}]} {
    %c0_i32 = arith.constant 0 : i32
    %0 = arith.cmpi eq, %arg1, %c0_i32 : i32
    %1 = arith.extui %0 : i1 to i32
    %c0_i32_0 = arith.constant 0 : i32
    %2 = arith.cmpi ne, %1, %c0_i32_0 : i32
    scf.if %2 {
      %cst_42 = arith.constant 0.000000e+00 : f32
      %144 = vector.broadcast %cst_42 : f32 to vector<8x128xf32>
      %c0_43 = arith.constant 0 : index
      %c0_44 = arith.constant 0 : index
      %145 = vector.load %arg5[%c0_43, %c0_44] : memref<8x128xf32, #tpu.memory_space<vmem>>, vector<8x128xf32>
      tpu.vector_store %arg5[%c0_43, %c0_44], %144 {strides = array<i32>} : memref<8x128xf32, #tpu.memory_space<vmem>>, vector<8x128xf32>,
      %cst_45 = arith.constant 0.000000e+00 : f32
      %146 = vector.broadcast %cst_45 : f32 to vector<8x128xf32>
      %c0_46 = arith.constant 0 : index
      %c0_47 = arith.constant 0 : index
      %147 = vector.load %arg6[%c0_46, %c0_47] : memref<8x128xf32, #tpu.memory_space<vmem>>, vector<8x128xf32>
      tpu.vector_store %arg6[%c0_46, %c0_47], %146 {strides = array<i32>} : memref<8x128xf32, #tpu.memory_space<vmem>>, vector<8x128xf32>,
    } else {
    }
    %c0 = arith.constant 0 : index
    %c0_1 = arith.constant 0 : index
    %3 = vector.load %arg3[%c0, %c0_1] : memref<128x512xf32, #tpu.memory_space<vmem>>, vector<128x512xf32>
    %c0_2 = arith.constant 0 : index
    %c0_3 = arith.constant 0 : index
    %4 = vector.load %arg5[%c0_2, %c0_3] : memref<8x128xf32, #tpu.memory_space<vmem>>, vector<8x128xf32>
    %c0_4 = arith.constant 0 : index
    %c0_5 = arith.constant 0 : index
    %5 = vector.load %arg6[%c0_4, %c0_5] : memref<8x128xf32, #tpu.memory_space<vmem>>, vector<8x128xf32>
    %c0_i32_6 = arith.constant 0 : i32
    %6 = arith.index_cast %c0_i32_6 : i32 to index
    %c0_7 = arith.constant 0 : index
    %c0_8 = arith.constant 0 : index
    %7 = vector.load %arg2[%6, %c0_7, %c0_8] : memref<4x8x512xf32, #tpu.memory_space<vmem>>, vector<1x8x512xf32>
    %8 = vector.shape_cast %7 : vector<1x8x512xf32> to vector<8x512xf32>
    %cst = arith.constant dense<0.000000e+00> : vector<8x512xf32>
    %9 = tpu.matmul %4, %3, %cst {dimension_numbers = #tpu.dot_dimension_numbers<[1], [0], [0], [1], [0, 0, 1, 1], [], []>} : vector<8x128xf32>, vector<128x512xf32>, vector<8x512xf32> -> vector<8x512xf32>
    %10 = arith.addf %8, %9 : vector<8x512xf32>
    %11 = vector.extract_strided_slice %10 {offsets = [0, 0], sizes = [8, 128], strides = [1, 1]} : vector<8x512xf32> to vector<8x128xf32>
    %12 = arith.negf %11 : vector<8x128xf32>
    %13 = math.exp %12 : vector<8x128xf32>
    %cst_9 = arith.constant 1.000000e+00 : f32
    %14 = vector.broadcast %cst_9 : f32 to vector<8x128xf32>
    %15 = arith.addf %14, %13 : vector<8x128xf32>
    %16 = arith.divf %14, %15 : vector<8x128xf32>
    %17 = vector.extract_strided_slice %10 {offsets = [0, 128], sizes = [8, 128], strides = [1, 1]} : vector<8x512xf32> to vector<8x128xf32>
    %18 = arith.negf %17 : vector<8x128xf32>
    %19 = math.exp %18 : vector<8x128xf32>
    %cst_10 = arith.constant 1.000000e+00 : f32
    %20 = vector.broadcast %cst_10 : f32 to vector<8x128xf32>
    %21 = arith.addf %20, %19 : vector<8x128xf32>
    %22 = arith.divf %20, %21 : vector<8x128xf32>
    %23 = vector.extract_strided_slice %10 {offsets = [0, 256], sizes = [8, 128], strides = [1, 1]} : vector<8x512xf32> to vector<8x128xf32>
    %24 = math.tanh %23 : vector<8x128xf32>
    %25 = vector.extract_strided_slice %10 {offsets = [0, 384], sizes = [8, 128], strides = [1, 1]} : vector<8x512xf32> to vector<8x128xf32>
    %26 = arith.negf %25 : vector<8x128xf32>
    %27 = math.exp %26 : vector<8x128xf32>
    %cst_11 = arith.constant 1.000000e+00 : f32
    %28 = vector.broadcast %cst_11 : f32 to vector<8x128xf32>
    %29 = arith.addf %28, %27 : vector<8x128xf32>
    %30 = arith.divf %28, %29 : vector<8x128xf32>
    %31 = arith.mulf %22, %5 : vector<8x128xf32>
    %32 = arith.mulf %16, %24 : vector<8x128xf32>
    %33 = arith.addf %31, %32 : vector<8x128xf32>
    %34 = math.tanh %33 : vector<8x128xf32>
    %35 = arith.mulf %30, %34 : vector<8x128xf32>
    %36 = arith.index_cast %c0_i32_6 : i32 to index
    %c0_12 = arith.constant 0 : index
    %c0_13 = arith.constant 0 : index
    %37 = vector.load %arg4[%36, %c0_12, %c0_13] : memref<4x8x128xf32, #tpu.memory_space<vmem>>, vector<1x8x128xf32>
    %38 = vector.shape_cast %37 : vector<1x8x128xf32> to vector<8x128xf32>
    %39 = vector.shape_cast %35 : vector<8x128xf32> to vector<1x8x128xf32>
    tpu.vector_store %arg4[%36, %c0_12, %c0_13], %39 {strides = array<i32>} : memref<4x8x128xf32, #tpu.memory_space<vmem>>, vector<1x8x128xf32>,
    %c1_i32 = arith.constant 1 : i32
    %40 = arith.index_cast %c1_i32 : i32 to index
    %c0_14 = arith.constant 0 : index
    %c0_15 = arith.constant 0 : index
    %41 = vector.load %arg2[%40, %c0_14, %c0_15] : memref<4x8x512xf32, #tpu.memory_space<vmem>>, vector<1x8x512xf32>
    %42 = vector.shape_cast %41 : vector<1x8x512xf32> to vector<8x512xf32>
    %cst_16 = arith.constant dense<0.000000e+00> : vector<8x512xf32>
    %43 = tpu.matmul %35, %3, %cst_16 {dimension_numbers = #tpu.dot_dimension_numbers<[1], [0], [0], [1], [0, 0, 1, 1], [], []>} : vector<8x128xf32>, vector<128x512xf32>, vector<8x512xf32> -> vector<8x512xf32>
    %44 = arith.addf %42, %43 : vector<8x512xf32>
    %45 = vector.extract_strided_slice %44 {offsets = [0, 0], sizes = [8, 128], strides = [1, 1]} : vector<8x512xf32> to vector<8x128xf32>
    %46 = arith.negf %45 : vector<8x128xf32>
    %47 = math.exp %46 : vector<8x128xf32>
    %cst_17 = arith.constant 1.000000e+00 : f32
    %48 = vector.broadcast %cst_17 : f32 to vector<8x128xf32>
    %49 = arith.addf %48, %47 : vector<8x128xf32>
    %50 = arith.divf %48, %49 : vector<8x128xf32>
    %51 = vector.extract_strided_slice %44 {offsets = [0, 128], sizes = [8, 128], strides = [1, 1]} : vector<8x512xf32> to vector<8x128xf32>
    %52 = arith.negf %51 : vector<8x128xf32>
    %53 = math.exp %52 : vector<8x128xf32>
    %cst_18 = arith.constant 1.000000e+00 : f32
    %54 = vector.broadcast %cst_18 : f32 to vector<8x128xf32>
    %55 = arith.addf %54, %53 : vector<8x128xf32>
    %56 = arith.divf %54, %55 : vector<8x128xf32>
    %57 = vector.extract_strided_slice %44 {offsets = [0, 256], sizes = [8, 128], strides = [1, 1]} : vector<8x512xf32> to vector<8x128xf32>
    %58 = math.tanh %57 : vector<8x128xf32>
    %59 = vector.extract_strided_slice %44 {offsets = [0, 384], sizes = [8, 128], strides = [1, 1]} : vector<8x512xf32> to vector<8x128xf32>
    %60 = arith.negf %59 : vector<8x128xf32>
    %61 = math.exp %60 : vector<8x128xf32>
    %cst_19 = arith.constant 1.000000e+00 : f32
    %62 = vector.broadcast %cst_19 : f32 to vector<8x128xf32>
    %63 = arith.addf %62, %61 : vector<8x128xf32>
    %64 = arith.divf %62, %63 : vector<8x128xf32>
    %65 = arith.mulf %56, %33 : vector<8x128xf32>
    %66 = arith.mulf %50, %58 : vector<8x128xf32>
    %67 = arith.addf %65, %66 : vector<8x128xf32>
    %68 = math.tanh %67 : vector<8x128xf32>
    %69 = arith.mulf %64, %68 : vector<8x128xf32>
    %70 = arith.index_cast %c1_i32 : i32 to index
    %c0_20 = arith.constant 0 : index
    %c0_21 = arith.constant 0 : index
    %71 = vector.load %arg4[%70, %c0_20, %c0_21] : memref<4x8x128xf32, #tpu.memory_space<vmem>>, vector<1x8x128xf32>
    %72 = vector.shape_cast %71 : vector<1x8x128xf32> to vector<8x128xf32>
    %73 = vector.shape_cast %69 : vector<8x128xf32> to vector<1x8x128xf32>
    tpu.vector_store %arg4[%70, %c0_20, %c0_21], %73 {strides = array<i32>} : memref<4x8x128xf32, #tpu.memory_space<vmem>>, vector<1x8x128xf32>,
    %c2_i32 = arith.constant 2 : i32
    %74 = arith.index_cast %c2_i32 : i32 to index
    %c0_22 = arith.constant 0 : index
    %c0_23 = arith.constant 0 : index
    %75 = vector.load %arg2[%74, %c0_22, %c0_23] : memref<4x8x512xf32, #tpu.memory_space<vmem>>, vector<1x8x512xf32>
    %76 = vector.shape_cast %75 : vector<1x8x512xf32> to vector<8x512xf32>
    %cst_24 = arith.constant dense<0.000000e+00> : vector<8x512xf32>
    %77 = tpu.matmul %69, %3, %cst_24 {dimension_numbers = #tpu.dot_dimension_numbers<[1], [0], [0], [1], [0, 0, 1, 1], [], []>} : vector<8x128xf32>, vector<128x512xf32>, vector<8x512xf32> -> vector<8x512xf32>
    %78 = arith.addf %76, %77 : vector<8x512xf32>
    %79 = vector.extract_strided_slice %78 {offsets = [0, 0], sizes = [8, 128], strides = [1, 1]} : vector<8x512xf32> to vector<8x128xf32>
    %80 = arith.negf %79 : vector<8x128xf32>
    %81 = math.exp %80 : vector<8x128xf32>
    %cst_25 = arith.constant 1.000000e+00 : f32
    %82 = vector.broadcast %cst_25 : f32 to vector<8x128xf32>
    %83 = arith.addf %82, %81 : vector<8x128xf32>
    %84 = arith.divf %82, %83 : vector<8x128xf32>
    %85 = vector.extract_strided_slice %78 {offsets = [0, 128], sizes = [8, 128], strides = [1, 1]} : vector<8x512xf32> to vector<8x128xf32>
    %86 = arith.negf %85 : vector<8x128xf32>
    %87 = math.exp %86 : vector<8x128xf32>
    %cst_26 = arith.constant 1.000000e+00 : f32
    %88 = vector.broadcast %cst_26 : f32 to vector<8x128xf32>
    %89 = arith.addf %88, %87 : vector<8x128xf32>
    %90 = arith.divf %88, %89 : vector<8x128xf32>
    %91 = vector.extract_strided_slice %78 {offsets = [0, 256], sizes = [8, 128], strides = [1, 1]} : vector<8x512xf32> to vector<8x128xf32>
    %92 = math.tanh %91 : vector<8x128xf32>
    %93 = vector.extract_strided_slice %78 {offsets = [0, 384], sizes = [8, 128], strides = [1, 1]} : vector<8x512xf32> to vector<8x128xf32>
    %94 = arith.negf %93 : vector<8x128xf32>
    %95 = math.exp %94 : vector<8x128xf32>
    %cst_27 = arith.constant 1.000000e+00 : f32
    %96 = vector.broadcast %cst_27 : f32 to vector<8x128xf32>
    %97 = arith.addf %96, %95 : vector<8x128xf32>
    %98 = arith.divf %96, %97 : vector<8x128xf32>
    %99 = arith.mulf %90, %67 : vector<8x128xf32>
    %100 = arith.mulf %84, %92 : vector<8x128xf32>
    %101 = arith.addf %99, %100 : vector<8x128xf32>
    %102 = math.tanh %101 : vector<8x128xf32>
    %103 = arith.mulf %98, %102 : vector<8x128xf32>
    %104 = arith.index_cast %c2_i32 : i32 to index
    %c0_28 = arith.constant 0 : index
    %c0_29 = arith.constant 0 : index
    %105 = vector.load %arg4[%104, %c0_28, %c0_29] : memref<4x8x128xf32, #tpu.memory_space<vmem>>, vector<1x8x128xf32>
    %106 = vector.shape_cast %105 : vector<1x8x128xf32> to vector<8x128xf32>
    %107 = vector.shape_cast %103 : vector<8x128xf32> to vector<1x8x128xf32>
    tpu.vector_store %arg4[%104, %c0_28, %c0_29], %107 {strides = array<i32>} : memref<4x8x128xf32, #tpu.memory_space<vmem>>, vector<1x8x128xf32>,
    %c3_i32 = arith.constant 3 : i32
    %108 = arith.index_cast %c3_i32 : i32 to index
    %c0_30 = arith.constant 0 : index
    %c0_31 = arith.constant 0 : index
    %109 = vector.load %arg2[%108, %c0_30, %c0_31] : memref<4x8x512xf32, #tpu.memory_space<vmem>>, vector<1x8x512xf32>
    %110 = vector.shape_cast %109 : vector<1x8x512xf32> to vector<8x512xf32>
    %cst_32 = arith.constant dense<0.000000e+00> : vector<8x512xf32>
    %111 = tpu.matmul %103, %3, %cst_32 {dimension_numbers = #tpu.dot_dimension_numbers<[1], [0], [0], [1], [0, 0, 1, 1], [], []>} : vector<8x128xf32>, vector<128x512xf32>, vector<8x512xf32> -> vector<8x512xf32>
    %112 = arith.addf %110, %111 : vector<8x512xf32>
    %113 = vector.extract_strided_slice %112 {offsets = [0, 0], sizes = [8, 128], strides = [1, 1]} : vector<8x512xf32> to vector<8x128xf32>
    %114 = arith.negf %113 : vector<8x128xf32>
    %115 = math.exp %114 : vector<8x128xf32>
    %cst_33 = arith.constant 1.000000e+00 : f32
    %116 = vector.broadcast %cst_33 : f32 to vector<8x128xf32>
    %117 = arith.addf %116, %115 : vector<8x128xf32>
    %118 = arith.divf %116, %117 : vector<8x128xf32>
    %119 = vector.extract_strided_slice %112 {offsets = [0, 128], sizes = [8, 128], strides = [1, 1]} : vector<8x512xf32> to vector<8x128xf32>
    %120 = arith.negf %119 : vector<8x128xf32>
    %121 = math.exp %120 : vector<8x128xf32>
    %cst_34 = arith.constant 1.000000e+00 : f32
    %122 = vector.broadcast %cst_34 : f32 to vector<8x128xf32>
    %123 = arith.addf %122, %121 : vector<8x128xf32>
    %124 = arith.divf %122, %123 : vector<8x128xf32>
    %125 = vector.extract_strided_slice %112 {offsets = [0, 256], sizes = [8, 128], strides = [1, 1]} : vector<8x512xf32> to vector<8x128xf32>
    %126 = math.tanh %125 : vector<8x128xf32>
    %127 = vector.extract_strided_slice %112 {offsets = [0, 384], sizes = [8, 128], strides = [1, 1]} : vector<8x512xf32> to vector<8x128xf32>
    %128 = arith.negf %127 : vector<8x128xf32>
    %129 = math.exp %128 : vector<8x128xf32>
    %cst_35 = arith.constant 1.000000e+00 : f32
    %130 = vector.broadcast %cst_35 : f32 to vector<8x128xf32>
    %131 = arith.addf %130, %129 : vector<8x128xf32>
    %132 = arith.divf %130, %131 : vector<8x128xf32>
    %133 = arith.mulf %124, %101 : vector<8x128xf32>
    %134 = arith.mulf %118, %126 : vector<8x128xf32>
    %135 = arith.addf %133, %134 : vector<8x128xf32>
    %136 = math.tanh %135 : vector<8x128xf32>
    %137 = arith.mulf %132, %136 : vector<8x128xf32>
    %138 = arith.index_cast %c3_i32 : i32 to index
    %c0_36 = arith.constant 0 : index
    %c0_37 = arith.constant 0 : index
    %139 = vector.load %arg4[%138, %c0_36, %c0_37] : memref<4x8x128xf32, #tpu.memory_space<vmem>>, vector<1x8x128xf32>
    %140 = vector.shape_cast %139 : vector<1x8x128xf32> to vector<8x128xf32>
    %141 = vector.shape_cast %137 : vector<8x128xf32> to vector<1x8x128xf32>
    tpu.vector_store %arg4[%138, %c0_36, %c0_37], %141 {strides = array<i32>} : memref<4x8x128xf32, #tpu.memory_space<vmem>>, vector<1x8x128xf32>,
    %c4_i32 = arith.constant 4 : i32
    %c0_38 = arith.constant 0 : index
    %c0_39 = arith.constant 0 : index
    %142 = vector.load %arg5[%c0_38, %c0_39] : memref<8x128xf32, #tpu.memory_space<vmem>>, vector<8x128xf32>
    tpu.vector_store %arg5[%c0_38, %c0_39], %137 {strides = array<i32>} : memref<8x128xf32, #tpu.memory_space<vmem>>, vector<8x128xf32>,
    %c0_40 = arith.constant 0 : index
    %c0_41 = arith.constant 0 : index
    %143 = vector.load %arg6[%c0_40, %c0_41] : memref<8x128xf32, #tpu.memory_space<vmem>>, vector<8x128xf32>
    tpu.vector_store %arg6[%c0_40, %c0_41], %135 {strides = array<i32>} : memref<8x128xf32, #tpu.memory_space<vmem>>, vector<8x128xf32>,
    return
  }
  func.func @transform_0(%arg0: i32, %arg1: i32) -> (i32, i32, i32) {
    %c0_i32 = arith.constant 0 : i32
    %c0_i32_0 = arith.constant 0 : i32
    return %arg1, %arg0, %c0_i32 : i32, i32, i32
  }
  func.func @transform_1(%arg0: i32, %arg1: i32) -> (i32, i32) {
    %c0_i32 = arith.constant 0 : i32
    %c0_i32_0 = arith.constant 0 : i32
    %c0_i32_1 = arith.constant 0 : i32
    return %c0_i32, %c0_i32_0 : i32, i32
  }
  func.func @transform_2(%arg0: i32, %arg1: i32) -> (i32, i32, i32) {
    %c0_i32 = arith.constant 0 : i32
    %c0_i32_0 = arith.constant 0 : i32
    return %arg1, %arg0, %c0_i32 : i32, i32, i32
  }
}

</mosaic_0001>

<llo_original>
// kernel: tpu_custom_call.1
$region0: #{tpu_custom_call.1}
  #allocation0 [shape = 'u32[]', space=smem, size = 0x4, offset = 0x4, fixed_abs, tag = 'smem constant byte address 0x4 - core index']
  #allocation1 [shape = 'u32[72,128]{1,0:T(1,128)}', space=vmem, size = 0x9000, scoped, tag = 'internal scratch']
  #allocation2 [shape = 'f32[8,128]{1,0:T(8,128)}', space=vmem, size = 0x1000, scoped, tag = 'scratch operand']
  #allocation3 [shape = 'f32[8,128]{1,0:T(8,128)}', space=vmem, size = 0x1000, scoped, tag = 'scratch operand']
  %s0 = inlined_call_operand.hbm [shape: f32[8,8,512], index: 0, kind: input, shape index: {}]
  %s1 = inlined_call_operand.hbm [shape: f32[128,512], index: 1, kind: input, shape index: {}]
  %s2 = inlined_call_operand.hbm [shape: f32[8,8,128], index: 2, kind: output, shape index: {}]
  %s3 = sld [smem:[#allocation0]]
  $region53: #{tpu_custom_call.1} parent=0
    _
  %s5 = ssub.s32 1, %s3
  %s6 = scalar_select 0, %s5, %s3
  $region1: #{tpu_custom_call.1} parent=0
    #allocation4 [shape = 'u8[131072]{0}', space=vmem, size = 0x20000, scoped, tag = 'input window, operand 0']
    #allocation5 [shape = 's32[2]{0}', space=sflag, size = 0x8, scoped, tag = 'scoped memory for tpu_custom_call.1']
    #allocation6 [shape = 's32[2]{0}', space=sflag, size = 0x8, scoped, tag = 'scoped memory for tpu_custom_call.1']
    #allocation7 [shape = 'u8[262144]{0}', space=vmem, size = 0x40000, scoped, tag = 'input window, operand 1, single buffered']
    #allocation8 [shape = 's32[1]{0}', space=sflag, size = 0x4, scoped, tag = 'scoped memory for tpu_custom_call.1']
    #allocation9 [shape = 'u8[32768]{0}', space=vmem, size = 0x8000, scoped, tag = 'output window, operand 0']
    %7 = vsyncpa [#allocation5], 0
    %s8 = scalar_lea.sflag [#allocation5], 1
    %9 = vsyncpa %s8, 0
    %10 = vsyncpa [#allocation8], 0
    %11 = vsyncpa [#allocation6], 0
    %s12 = scalar_lea.sflag [#allocation6], 1
    %13 = vsyncpa %s12, 0
    loop: start=0, step=1, limit=4
    $region2: #{tpu_custom_call.1} parent=1 // loop_pre_header
      _
    $region3: #{tpu_custom_call.1} parent=1 // loop_header
      %s15 = sphi 0, %s19
      %p16 = scmp.ge.s32.totalorder %s15, 4
      %s22 = sphi 0, %s34
      %s23 = sphi 0, %s30
      %s24 = sphi 0, %s22
      %s25 = sphi 0, %s23
      %s26 = sphi 0, %s24
      %s27 = sphi 0, %s25
      %s39 = sphi 0, %s41
      %s42 = sphi 0, %s39
      %s43 = sphi 0, %s42
      %s59 = sphi 0, %s43
      %s63 = sphi 0, %s63
      %s65 = sphi 0, %s63
      %s66 = sphi 0, %s65
      %s80 = sphi 0, %s66
      %s88 = sphi 0, %s90
      %s91 = sphi 0, %s88
      %s92 = sphi 0, %s91
      %s108 = sphi 0, %s92
    $region4: #{tpu_custom_call.1} parent=1 // loop_header_branch
      %18 = sbr.rel (%p16) target = $region8
    $region5: #{tpu_custom_call.1} parent=1 // loop_body
      %s20 = ssub.s32 %s15, 1
      %s21 = ssub.s32 %s15, 2
      %s28 = sadd.s32 1, %s23
      %p29 = scmp.ge.s32.totalorder %s28, 2
      %s30 = scalar_select %p29, 0, %s28
      %s31 = sadd.s32 1, %s22
      %s32 = scalar_select %p29, %s31, %s22
      %p33 = scmp.ge.s32.totalorder %s32, 1
      %s34 = scalar_select %p33, 0, %s32
      %s35 = ssub.s32 %s23, %s30
      %s36 = ssub.s32 %s22, %s34
      %s37 = sor.u32 %s35, %s36
      %p38 = scmp.eq.s32.totalorder %s37, 0
      %s40 = sadd.s32 %s39, 1
      %s41 = scalar_select %p38, %s39, %s40
      %p44 = pneg %p38
      %p45 = scmp.eq.s32.totalorder %s15, 1
      %p46 = por %p44, %p45
      %p47 = scmp.ne.s32.totalorder %s39, %s42
      %p48 = scmp.eq.s32.totalorder %s15, 0
      %p49 = por %p47, %p48
      %p50 = scmp.ne.s32.totalorder %s39, %s42
      %p51 = scmp.eq.s32.totalorder %s20, 1
      %p52 = por %p50, %p51
      %p53 = scmp.ne.s32.totalorder %s42, %s43
      %p54 = scmp.eq.s32.totalorder %s20, 0
      %p55 = por %p53, %p54
      %p56 = scmp.ne.s32.totalorder %s42, %s43
      %p57 = scmp.eq.s32.totalorder %s21, 1
      %p58 = por %p56, %p57
      %p60 = scmp.ne.s32.totalorder %s43, %s59
      %p61 = scmp.eq.s32.totalorder %s21, 0
      %p62 = por %p60, %p61
      %s64 = sadd.s32 %s63, 1
      %p67 = scmp.eq.s32.totalorder %s15, 1
      %p68 = scmp.ne.s32.totalorder %s63, %s65
      %p69 = scmp.eq.s32.totalorder %s15, 0
      %p70 = por %p68, %p69
      %p71 = scmp.ne.s32.totalorder %s63, %s65
      %p72 = scmp.eq.s32.totalorder %s20, 1
      %p73 = por %p71, %p72
      %p74 = scmp.ne.s32.totalorder %s65, %s66
      %p75 = scmp.eq.s32.totalorder %s20, 0
      %p76 = por %p74, %p75
      %p77 = scmp.ne.s32.totalorder %s65, %s66
      %p78 = scmp.eq.s32.totalorder %s21, 1
      %p79 = por %p77, %p78
      %p81 = scmp.ne.s32.totalorder %s66, %s80
      %p82 = scmp.eq.s32.totalorder %s21, 0
      %p83 = por %p81, %p82
      %s84 = ssub.s32 %s23, %s30
      %s85 = ssub.s32 %s22, %s34
      %s86 = sor.u32 %s84, %s85
      %p87 = scmp.eq.s32.totalorder %s86, 0
      %s89 = sadd.s32 %s88, 1
      %s90 = scalar_select %p87, %s88, %s89
      %p93 = pneg %p87
      %p94 = scmp.eq.s32.totalorder %s15, 1
      %p95 = por %p93, %p94
      %p96 = scmp.ne.s32.totalorder %s88, %s91
      %p97 = scmp.eq.s32.totalorder %s15, 0
      %p98 = por %p96, %p97
      %p99 = scmp.ne.s32.totalorder %s88, %s91
      %p100 = scmp.eq.s32.totalorder %s20, 1
      %p101 = por %p99, %p100
      %p102 = scmp.ne.s32.totalorder %s91, %s92
      %p103 = scmp.eq.s32.totalorder %s20, 0
      %p104 = por %p102, %p103
      %p105 = scmp.ne.s32.totalorder %s91, %s92
      %p106 = scmp.eq.s32.totalorder %s21, 1
      %p107 = por %p105, %p106
      %p109 = scmp.ne.s32.totalorder %s92, %s108
      %p110 = scmp.eq.s32.totalorder %s21, 0
      %p111 = por %p109, %p110
      %p112 = scmp.le.s32.totalorder 1, %s15
      %p113 = scmp.lt.s32.totalorder %s15, 3
      %p114 = pnand %p112, %p113
      %p115 = pneg %p114
      // Predicated region
      $region9: #{tpu_custom_call.1} parent=5 // pred_check
        _
      $region10: #{tpu_custom_call.1} parent=5 // pred_check_branch
        %117 = sbr.rel (%p114) target = $region12
      $region11: #{tpu_custom_call.1} parent=5 // pred_region
        %s118 = ssub.s32 %s15, 1
        // Predicated region
        $region13: #{tpu_custom_call.1} parent=11 // pred_check
          %p119 = pneg %p76
        $region14: #{tpu_custom_call.1} parent=11 // pred_check_branch
          %121 = sbr.rel (%p119) target = $region16
        $region15: #{tpu_custom_call.1} parent=11 // pred_region
          %123 = vsyncadd [#allocation8], 0
          %s124 = sshll.u32 %s1, 4
          %s125 = int_to_ptr.hbm [resolvable:$true] %s124
          %s126 = sshll.u32 [#allocation7], 4
          %s127 = int_to_ptr.vmem [resolvable:$true] %s126
          %132 = dma.hbm_to_vmem [thread:$0]  %s125, 8192, %s127, [#allocation8], 512, 512, 32
        $region16: #{tpu_custom_call.1} parent=11 // pred_fallthru
          _
      $region12: #{tpu_custom_call.1} parent=5 // pred_fallthru
        _
      %p133 = scmp.lt.s32.totalorder %s15, 2
      // Predicated region
      $region17: #{tpu_custom_call.1} parent=5 // pred_check
        %p134 = pneg %p133
      $region18: #{tpu_custom_call.1} parent=5 // pred_check_branch
        %136 = sbr.rel (%p134) target = $region20
      $region19: #{tpu_custom_call.1} parent=5 // pred_region
        // Predicated region
        $region21: #{tpu_custom_call.1} parent=19 // pred_check
          %p137 = pneg %p49
        $region22: #{tpu_custom_call.1} parent=19 // pred_check_branch
          %139 = sbr.rel (%p137) target = $region24
        $region23: #{tpu_custom_call.1} parent=19 // pred_region
          %s140 = sand.u32 %s39, 1
          %s141 = scalar_lea.sflag [#allocation5], %s140
          %s142 = sand.u32 %s39, 1
          %s143 = smul.addr %s142, 128
          %s144 = scalar_lea.vmem [#allocation4], %s143
          %s145 = smul.u32 4, %s23
          %147 = vsyncadd %s141, 0
          %s148 = smul.addr %s22, 4
          %s149 = smul.addr %s145, 4
          %s150 = sadd.s32 %s148, %s149
          %s151 = smul.addr %s150, 8
          %s152 = scalar_lea.hbm %s0, %s151
          %s153 = sshll.u32 %s152, 4
          %s154 = int_to_ptr.hbm [resolvable:$true] %s153
          %s155 = sshll.u32 %s144, 4
          %s156 = int_to_ptr.vmem [resolvable:$true] %s155
          %161 = dma.hbm_to_vmem [thread:$0]  %s154, 2048, %s156, %s141, 512, 512, 32
        $region24: #{tpu_custom_call.1} parent=19 // pred_fallthru
          _
      $region20: #{tpu_custom_call.1} parent=5 // pred_fallthru
        _
      %p162 = scmp.le.s32.totalorder 1, %s15
      %p163 = scmp.lt.s32.totalorder %s15, 3
      %p164 = pnand %p162, %p163
      %p165 = pneg %p164
      // Predicated region
      $region25: #{tpu_custom_call.1} parent=5 // pred_check
        _
      $region26: #{tpu_custom_call.1} parent=5 // pred_check_branch
        %167 = sbr.rel (%p164) target = $region28
      $region27: #{tpu_custom_call.1} parent=5 // pred_region
        %s168 = ssub.s32 %s15, 1
        %s169 = sand.u32 %s42, 1
        %s170 = scalar_lea.sflag [#allocation5], %s169
        %s171 = sand.u32 %s42, 1
        %s172 = smul.addr %s171, 128
        %s173 = scalar_lea.vmem [#allocation4], %s172
        // Predicated region
        $region29: #{tpu_custom_call.1} parent=27 // pred_check
          %p174 = pneg %p55
        $region30: #{tpu_custom_call.1} parent=27 // pred_check_branch
          %176 = sbr.rel (%p174) target = $region32
        $region31: #{tpu_custom_call.1} parent=27 // pred_region
          %178 = dma.done %s170, 2048
        $region32: #{tpu_custom_call.1} parent=27 // pred_fallthru
          _
        // Predicated region
        $region33: #{tpu_custom_call.1} parent=27 // pred_check
          %p179 = pneg %p76
        $region34: #{tpu_custom_call.1} parent=27 // pred_check_branch
          %181 = sbr.rel (%p179) target = $region36
        $region35: #{tpu_custom_call.1} parent=27 // pred_region
          %183 = dma.done [#allocation8], 8192
        $region36: #{tpu_custom_call.1} parent=27 // pred_fallthru
          _
        %s184 = sand.u32 %s42, 1
        %s185 = scalar_lea.sflag [#allocation5], %s184
        %s186 = sand.u32 %s42, 1
        %s187 = smul.addr %s186, 128
        %s188 = scalar_lea.vmem [#allocation4], %s187
        %p189 = pneg %p55
        %p190 = pneg %p52
        %p191 = pneg %p76
        %p192 = pneg %p73
        %p193 = pneg %p104
        %p194 = pneg %p101
        %s195 = sand.u32 %s91, 1
        %s196 = scalar_lea.sflag [#allocation6], %s195
        %s197 = sand.u32 %s91, 1
        %s198 = smul.addr %s197, 32
        %s199 = scalar_lea.vmem [#allocation9], %s198
        %s200 = smul.u32 4, %s25
        %s201 = smul.u32 4, %s25
        %p202 = scmp.eq.s32.totalorder %s25, 0
        // Predicated region
        $region37: #{tpu_custom_call.1} parent=27 // pred_check
          %p203 = pneg %p202
        $region38: #{tpu_custom_call.1} parent=27 // pred_check_branch
          %205 = sbr.rel (%p203) target = $region40
        $region39: #{tpu_custom_call.1} parent=27 // pred_region
          %206 = vst [vmem:[#allocation2] sm:$0xff] 0.0
          %207 = vst [vmem:[#allocation3] sm:$0xff] 0.0
        $region40: #{tpu_custom_call.1} parent=27 // pred_fallthru
          _
        %v208 = vld [vmem:[#allocation7] sm:$0xff]
        %v209 = vld [vmem:[#allocation7 + $0x8] sm:$0xff]
        %v210 = vld [vmem:[#allocation7 + $0x10] sm:$0xff]
        %v211 = vld [vmem:[#allocation7 + $0x18] sm:$0xff]
        %v212 = vld [vmem:[#allocation7 + $0x20] sm:$0xff]
        %v213 = vld [vmem:[#allocation7 + $0x28] sm:$0xff]
        %v214 = vld [vmem:[#allocation7 + $0x30] sm:$0xff]
        %v215 = vld [vmem:[#allocation7 + $0x38] sm:$0xff]
        %v216 = vld [vmem:[#allocation7 + $0x40] sm:$0xff]
        %v217 = vld [vmem:[#allocation7 + $0x48] sm:$0xff]
        %v218 = vld [vmem:[#allocation7 + $0x50] sm:$0xff]
        %v219 = vld [vmem:[#allocation7 + $0x58] sm:$0xff]
        %v220 = vld [vmem:[#allocation7 + $0x60] sm:$0xff]
        %v221 = vld [vmem:[#allocation7 + $0x68] sm:$0xff]
        %v222 = vld [vmem:[#allocation7 + $0x70] sm:$0xff]
        %v223 = vld [vmem:[#allocation7 + $0x78] sm:$0xff]
        %v224 = vld [vmem:[#allocation7 + $0x80] sm:$0xff]
        %v225 = vld [vmem:[#allocation7 + $0x88] sm:$0xff]
        %v226 = vld [vmem:[#allocation7 + $0x90] sm:$0xff]
        %v227 = vld [vmem:[#allocation7 + $0x98] sm:$0xff]
        %v228 = vld [vmem:[#allocation7 + $0xa0] sm:$0xff]
        %v229 = vld [vmem:[#allocation7 + $0xa8] sm:$0xff]
        %v230 = vld [vmem:[#allocation7 + $0xb0] sm:$0xff]
        %v231 = vld [vmem:[#allocation7 + $0xb8] sm:$0xff]
        %v232 = vld [vmem:[#allocation7 + $0xc0] sm:$0xff]
        %v233 = vld [vmem:[#allocation7 + $0xc8] sm:$0xff]
        %v234 = vld [vmem:[#allocation7 + $0xd0] sm:$0xff]
        %v235 = vld [vmem:[#allocation7 + $0xd8] sm:$0xff]
        %v236 = vld [vmem:[#allocation7 + $0xe0] sm:$0xff]
        %v237 = vld [vmem:[#allocation7 + $0xe8] sm:$0xff]
        %v238 = vld [vmem:[#allocation7 + $0xf0] sm:$0xff]
        %v239 = vld [vmem:[#allocation7 + $0xf8] sm:$0xff]
        %v240 = vld [vmem:[#allocation7 + $0x100] sm:$0xff]
        %v241 = vld [vmem:[#allocation7 + $0x108] sm:$0xff]
        %v242 = vld [vmem:[#allocation7 + $0x110] sm:$0xff]
        %v243 = vld [vmem:[#allocation7 + $0x118] sm:$0xff]
        %v244 = vld [vmem:[#allocation7 + $0x120] sm:$0xff]
        %v245 = vld [vmem:[#allocation7 + $0x128] sm:$0xff]
        %v246 = vld [vmem:[#allocation7 + $0x130] sm:$0xff]
        %v247 = vld [vmem:[#allocation7 + $0x138] sm:$0xff]
        %v248 = vld [vmem:[#allocation7 + $0x140] sm:$0xff]
        %v249 = vld [vmem:[#allocation7 + $0x148] sm:$0xff]
        %v250 = vld [vmem:[#allocation7 + $0x150] sm:$0xff]
        %v251 = vld [vmem:[#allocation7 + $0x158] sm:$0xff]
        %v252 = vld [vmem:[#allocation7 + $0x160] sm:$0xff]
        %v253 = vld [vmem:[#allocation7 + $0x168] sm:$0xff]
        %v254 = vld [vmem:[#allocation7 + $0x170] sm:$0xff]
        %v255 = vld [vmem:[#allocation7 + $0x178] sm:$0xff]
        %v256 = vld [vmem:[#allocation7 + $0x180] sm:$0xff]
        %v257 = vld [vmem:[#allocation7 + $0x188] sm:$0xff]
        %v258 = vld [vmem:[#allocation7 + $0x190] sm:$0xff]
        %v259 = vld [vmem:[#allocation7 + $0x198] sm:$0xff]
        %v260 = vld [vmem:[#allocation7 + $0x1a0] sm:$0xff]
        %v261 = vld [vmem:[#allocation7 + $0x1a8] sm:$0xff]
        %v262 = vld [vmem:[#allocation7 + $0x1b0] sm:$0xff]
        %v263 = vld [vmem:[#allocation7 + $0x1b8] sm:$0xff]
        %v264 = vld [vmem:[#allocation7 + $0x1c0] sm:$0xff]
        %v265 = vld [vmem:[#allocation7 + $0x1c8] sm:$0xff]
        %v266 = vld [vmem:[#allocation7 + $0x1d0] sm:$0xff]
        %v267 = vld [vmem:[#allocation7 + $0x1d8] sm:$0xff]
        %v268 = vld [vmem:[#allocation7 + $0x1e0] sm:$0xff]
        %v269 = vld [vmem:[#allocation7 + $0x1e8] sm:$0xff]
        %v270 = vld [vmem:[#allocation7 + $0x1f0] sm:$0xff]
        %v271 = vld [vmem:[#allocation7 + $0x1f8] sm:$0xff]
        %v272 = vld [vmem:[#allocation2] sm:$0xff]
        %v273 = vld [vmem:[#allocation3] sm:$0xff]
        %v274 = vld [vmem:[%s173] sm:$0xff]
        %v275 = vld [vmem:[%s173 + $0x8] sm:$0xff]
        %v276 = vld [vmem:[%s173 + $0x10] sm:$0xff]
        %v277 = vld [vmem:[%s173 + $0x18] sm:$0xff]
        %278 = vmatpush.msra.mxu0 %v268
        %279 = vmatpush.msra.mxu0 %v264
        %280 = vmatpush.msra.mxu0 %v260
        %281 = vmatpush.msra.mxu0 %v256
        %282 = vmatpush.msra.mxu0 %v252
        %283 = vmatpush.msra.mxu0 %v248
        %284 = vmatpush.msra.mxu0 %v244
        %285 = vmatpush.msra.mxu0 %v240
        %286 = vmatpush.msra.mxu0 %v236
        %287 = vmatpush.msra.mxu0 %v232
        %288 = vmatpush.msra.mxu0 %v228
        %289 = vmatpush.msra.mxu0 %v224
        %290 = vmatpush.msra.mxu0 %v220
        %291 = vmatpush.msra.mxu0 %v216
        %292 = vmatpush.msra.mxu0 %v212
        %293 = vmatpush.msra.mxu0 %v208
        %294 = vmatmul.f32.gmra.mxu0 %v272
        %v295 = vpop.f32.mrf.mxu0
        %v296 = vadd.f32 0.0, %v295
        %297 = vdwg.mxu0
        %298 = vmatpush.msra.mxu0 %v269
        %299 = vmatpush.msra.mxu0 %v265
        %300 = vmatpush.msra.mxu0 %v261
        %301 = vmatpush.msra.mxu0 %v257
        %302 = vmatpush.msra.mxu0 %v253
        %303 = vmatpush.msra.mxu0 %v249
        %304 = vmatpush.msra.mxu0 %v245
        %305 = vmatpush.msra.mxu0 %v241
        %306 = vmatpush.msra.mxu0 %v237
        %307 = vmatpush.msra.mxu0 %v233
        %308 = vmatpush.msra.mxu0 %v229
        %309 = vmatpush.msra.mxu0 %v225
        %310 = vmatpush.msra.mxu0 %v221
        %311 = vmatpush.msra.mxu0 %v217
        %312 = vmatpush.msra.mxu0 %v213
        %313 = vmatpush.msra.mxu0 %v209
        %314 = vmatmul.f32.gmra.mxu0 %v272
        %v315 = vpop.f32.mrf.mxu0
        %v316 = vadd.f32 0.0, %v315
        %317 = vdwg.mxu0
        %318 = vmatpush.msra.mxu0 %v270
        %319 = vmatpush.msra.mxu0 %v266
        %320 = vmatpush.msra.mxu0 %v262
        %321 = vmatpush.msra.mxu0 %v258
        %322 = vmatpush.msra.mxu0 %v254
        %323 = vmatpush.msra.mxu0 %v250
        %324 = vmatpush.msra.mxu0 %v246
        %325 = vmatpush.msra.mxu0 %v242
        %326 = vmatpush.msra.mxu0 %v238
        %327 = vmatpush.msra.mxu0 %v234
        %328 = vmatpush.msra.mxu0 %v230
        %329 = vmatpush.msra.mxu0 %v226
        %330 = vmatpush.msra.mxu0 %v222
        %331 = vmatpush.msra.mxu0 %v218
        %332 = vmatpush.msra.mxu0 %v214
        %333 = vmatpush.msra.mxu0 %v210
        %334 = vmatmul.f32.gmra.mxu0 %v272
        %v335 = vpop.f32.mrf.mxu0
        %v336 = vadd.f32 0.0, %v335
        %337 = vdwg.mxu0
        %338 = vmatpush.msra.mxu0 %v271
        %339 = vmatpush.msra.mxu0 %v267
        %340 = vmatpush.msra.mxu0 %v263
        %341 = vmatpush.msra.mxu0 %v259
        %342 = vmatpush.msra.mxu0 %v255
        %343 = vmatpush.msra.mxu0 %v251
        %344 = vmatpush.msra.mxu0 %v247
        %345 = vmatpush.msra.mxu0 %v243
        %346 = vmatpush.msra.mxu0 %v239
        %347 = vmatpush.msra.mxu0 %v235
        %348 = vmatpush.msra.mxu0 %v231
        %349 = vmatpush.msra.mxu0 %v227
        %350 = vmatpush.msra.mxu0 %v223
        %351 = vmatpush.msra.mxu0 %v219
        %352 = vmatpush.msra.mxu0 %v215
        %353 = vmatpush.msra.mxu0 %v211
        %354 = vmatmul.f32.gmra.mxu0 %v272
        %v355 = vpop.f32.mrf.mxu0
        %v356 = vadd.f32 0.0, %v355
        %357 = vdwg.mxu0
        %v358 = vadd.f32 %v274, %v296
        %v359 = vadd.f32 %v275, %v316
        %v360 = vadd.f32 %v276, %v336
        %v361 = vadd.f32 %v277, %v356
        %v362 = vxor.u32 %v358, 2147483648
        %v363 = vmul.f32 %v362, 1.442695
        %v364 = vpow.pop %v363
        %v365 = vadd.f32 %v364, 1.0
        %v366 = vrcp.pop %v365
        %v367 = vmul.f32 %v365, %v366
        %v368 = vsub.f32 1.0, %v367
        %v369 = vmul.f32 %v366, %v368
        %v370 = vadd.f32 %v366, %v369
        %vm371 = vweird.f32 %v365
        %vm372 = vweird.f32 %v366
        %vm373 = vmor %vm371, %vm372
        %v374 = vsel %vm373, %v366, %v370
        %v375 = vand.u32 2147483647, %v365
        %vm376 = vcmp.eq.f32.partialorder %v375, 8.507059e+37
        %v377 = vand.u32 %v365, 2147483648
        %v378 = vor.u32 1.1754944e-38, %v377
        %v379 = vsel %vm376, %v378, %v374
        %v380 = vmul.f32 1.0, %v379
        %v381 = vxor.u32 %v359, 2147483648
        %v382 = vmul.f32 %v381, 1.442695
        %v383 = vpow.pop %v382
        %v384 = vadd.f32 %v383, 1.0
        %v385 = vrcp.pop %v384
        %v386 = vmul.f32 %v384, %v385
        %v387 = vsub.f32 1.0, %v386
        %v388 = vmul.f32 %v385, %v387
        %v389 = vadd.f32 %v385, %v388
        %vm390 = vweird.f32 %v384
        %vm391 = vweird.f32 %v385
        %vm392 = vmor %vm390, %vm391
        %v393 = vsel %vm392, %v385, %v389
        %v394 = vand.u32 2147483647, %v384
        %vm395 = vcmp.eq.f32.partialorder %v394, 8.507059e+37
        %v396 = vand.u32 %v384, 2147483648
        %v397 = vor.u32 1.1754944e-38, %v396
        %v398 = vsel %vm395, %v397, %v393
        %v399 = vmul.f32 1.0, %v398
        %v400 = vtanh.pop %v360
        %v401 = vxor.u32 %v361, 2147483648
        %v402 = vmul.f32 %v401, 1.442695
        %v403 = vpow.pop %v402
        %v404 = vadd.f32 %v403, 1.0
        %v405 = vrcp.pop %v404
        %v406 = vmul.f32 %v404, %v405
        %v407 = vsub.f32 1.0, %v406
        %v408 = vmul.f32 %v405, %v407
        %v409 = vadd.f32 %v405, %v408
        %vm410 = vweird.f32 %v404
        %vm411 = vweird.f32 %v405
        %vm412 = vmor %vm410, %vm411
        %v413 = vsel %vm412, %v405, %v409
        %v414 = vand.u32 2147483647, %v404
        %vm415 = vcmp.eq.f32.partialorder %v414, 8.507059e+37
        %v416 = vand.u32 %v404, 2147483648
        %v417 = vor.u32 1.1754944e-38, %v416
        %v418 = vsel %vm415, %v417, %v413
        %v419 = vmul.f32 1.0, %v418
        %v420 = vmul.f32 %v399, %v273
        %v421 = vmul.f32 %v380, %v400
        %v422 = vadd.f32 %v420, %v421
        %v423 = vtanh.pop %v422
        %v424 = vmul.f32 %v419, %v423
        %425 = vst [vmem:[%s199] sm:$0xff] %v424
        %s426 = scalar_lea.vmem %s173, 32 [#allocation4]
        %v427 = vld [vmem:[%s426] sm:$0xff]
        %v428 = vld [vmem:[%s426 + $0x8] sm:$0xff]
        %v429 = vld [vmem:[%s426 + $0x10] sm:$0xff]
        %v430 = vld [vmem:[%s426 + $0x18] sm:$0xff]
        %431 = vmatpush.msra.mxu0 %v268
        %432 = vmatpush.msra.mxu0 %v264
        %433 = vmatpush.msra.mxu0 %v260
        %434 = vmatpush.msra.mxu0 %v256
        %435 = vmatpush.msra.mxu0 %v252
        %436 = vmatpush.msra.mxu0 %v248
        %437 = vmatpush.msra.mxu0 %v244
        %438 = vmatpush.msra.mxu0 %v240
        %439 = vmatpush.msra.mxu0 %v236
        %440 = vmatpush.msra.mxu0 %v232
        %441 = vmatpush.msra.mxu0 %v228
        %442 = vmatpush.msra.mxu0 %v224
        %443 = vmatpush.msra.mxu0 %v220
        %444 = vmatpush.msra.mxu0 %v216
        %445 = vmatpush.msra.mxu0 %v212
        %446 = vmatpush.msra.mxu0 %v208
        %447 = vmatmul.f32.gmra.mxu0 %v424
        %v448 = vpop.f32.mrf.mxu0
        %v449 = vadd.f32 0.0, %v448
        %450 = vdwg.mxu0
        %451 = vmatpush.msra.mxu0 %v269
        %452 = vmatpush.msra.mxu0 %v265
        %453 = vmatpush.msra.mxu0 %v261
        %454 = vmatpush.msra.mxu0 %v257
        %455 = vmatpush.msra.mxu0 %v253
        %456 = vmatpush.msra.mxu0 %v249
        %457 = vmatpush.msra.mxu0 %v245
        %458 = vmatpush.msra.mxu0 %v241
        %459 = vmatpush.msra.mxu0 %v237
        %460 = vmatpush.msra.mxu0 %v233
        %461 = vmatpush.msra.mxu0 %v229
        %462 = vmatpush.msra.mxu0 %v225
        %463 = vmatpush.msra.mxu0 %v221
        %464 = vmatpush.msra.mxu0 %v217
        %465 = vmatpush.msra.mxu0 %v213
        %466 = vmatpush.msra.mxu0 %v209
        %467 = vmatmul.f32.gmra.mxu0 %v424
        %v468 = vpop.f32.mrf.mxu0
        %v469 = vadd.f32 0.0, %v468
        %470 = vdwg.mxu0
        %471 = vmatpush.msra.mxu0 %v270
        %472 = vmatpush.msra.mxu0 %v266
        %473 = vmatpush.msra.mxu0 %v262
        %474 = vmatpush.msra.mxu0 %v258
        %475 = vmatpush.msra.mxu0 %v254
        %476 = vmatpush.msra.mxu0 %v250
        %477 = vmatpush.msra.mxu0 %v246
        %478 = vmatpush.msra.mxu0 %v242
        %479 = vmatpush.msra.mxu0 %v238
        %480 = vmatpush.msra.mxu0 %v234
        %481 = vmatpush.msra.mxu0 %v230
        %482 = vmatpush.msra.mxu0 %v226
        %483 = vmatpush.msra.mxu0 %v222
        %484 = vmatpush.msra.mxu0 %v218
        %485 = vmatpush.msra.mxu0 %v214
        %486 = vmatpush.msra.mxu0 %v210
        %487 = vmatmul.f32.gmra.mxu0 %v424
        %v488 = vpop.f32.mrf.mxu0
        %v489 = vadd.f32 0.0, %v488
        %490 = vdwg.mxu0
        %491 = vmatpush.msra.mxu0 %v271
        %492 = vmatpush.msra.mxu0 %v267
        %493 = vmatpush.msra.mxu0 %v263
        %494 = vmatpush.msra.mxu0 %v259
        %495 = vmatpush.msra.mxu0 %v255
        %496 = vmatpush.msra.mxu0 %v251
        %497 = vmatpush.msra.mxu0 %v247
        %498 = vmatpush.msra.mxu0 %v243
        %499 = vmatpush.msra.mxu0 %v239
        %500 = vmatpush.msra.mxu0 %v235
        %501 = vmatpush.msra.mxu0 %v231
        %502 = vmatpush.msra.mxu0 %v227
        %503 = vmatpush.msra.mxu0 %v223
        %504 = vmatpush.msra.mxu0 %v219
        %505 = vmatpush.msra.mxu0 %v215
        %506 = vmatpush.msra.mxu0 %v211
        %507 = vmatmul.f32.gmra.mxu0 %v424
        %v508 = vpop.f32.mrf.mxu0
        %v509 = vadd.f32 0.0, %v508
        %510 = vdwg.mxu0
        %v511 = vadd.f32 %v427, %v449
        %v512 = vadd.f32 %v428, %v469
        %v513 = vadd.f32 %v429, %v489
        %v514 = vadd.f32 %v430, %v509
        %v515 = vxor.u32 %v511, 2147483648
        %v516 = vmul.f32 %v515, 1.442695
        %v517 = vpow.pop %v516
        %v518 = vadd.f32 %v517, 1.0
        %v519 = vrcp.pop %v518
        %v520 = vmul.f32 %v518, %v519
        %v521 = vsub.f32 1.0, %v520
        %v522 = vmul.f32 %v519, %v521
        %v523 = vadd.f32 %v519, %v522
        %vm524 = vweird.f32 %v518
        %vm525 = vweird.f32 %v519
        %vm526 = vmor %vm524, %vm525
        %v527 = vsel %vm526, %v519, %v523
        %v528 = vand.u32 2147483647, %v518
        %vm529 = vcmp.eq.f32.partialorder %v528, 8.507059e+37
        %v530 = vand.u32 %v518, 2147483648
        %v531 = vor.u32 1.1754944e-38, %v530
        %v532 = vsel %vm529, %v531, %v527
        %v533 = vmul.f32 1.0, %v532
        %v534 = vxor.u32 %v512, 2147483648
        %v535 = vmul.f32 %v534, 1.442695
        %v536 = vpow.pop %v535
        %v537 = vadd.f32 %v536, 1.0
        %v538 = vrcp.pop %v537
        %v539 = vmul.f32 %v537, %v538
        %v540 = vsub.f32 1.0, %v539
        %v541 = vmul.f32 %v538, %v540
        %v542 = vadd.f32 %v538, %v541
        %vm543 = vweird.f32 %v537
        %vm544 = vweird.f32 %v538
        %vm545 = vmor %vm543, %vm544
        %v546 = vsel %vm545, %v538, %v542
        %v547 = vand.u32 2147483647, %v537
        %vm548 = vcmp.eq.f32.partialorder %v547, 8.507059e+37
        %v549 = vand.u32 %v537, 2147483648
        %v550 = vor.u32 1.1754944e-38, %v549
        %v551 = vsel %vm548, %v550, %v546
        %v552 = vmul.f32 1.0, %v551
        %v553 = vtanh.pop %v513
        %v554 = vxor.u32 %v514, 2147483648
        %v555 = vmul.f32 %v554, 1.442695
        %v556 = vpow.pop %v555
        %v557 = vadd.f32 %v556, 1.0
        %v558 = vrcp.pop %v557
        %v559 = vmul.f32 %v557, %v558
        %v560 = vsub.f32 1.0, %v559
        %v561 = vmul.f32 %v558, %v560
        %v562 = vadd.f32 %v558, %v561
        %vm563 = vweird.f32 %v557
        %vm564 = vweird.f32 %v558
        %vm565 = vmor %vm563, %vm564
        %v566 = vsel %vm565, %v558, %v562
        %v567 = vand.u32 2147483647, %v557
        %vm568 = vcmp.eq.f32.partialorder %v567, 8.507059e+37
        %v569 = vand.u32 %v557, 2147483648
        %v570 = vor.u32 1.1754944e-38, %v569
        %v571 = vsel %vm568, %v570, %v566
        %v572 = vmul.f32 1.0, %v571
        %v573 = vmul.f32 %v552, %v422
        %v574 = vmul.f32 %v533, %v553
        %v575 = vadd.f32 %v573, %v574
        %v576 = vtanh.pop %v575
        %v577 = vmul.f32 %v572, %v576
        %s578 = scalar_lea.vmem %s199, 8 [#allocation9]
        %579 = vst [vmem:[%s578] sm:$0xff] %v577
        %s580 = scalar_lea.vmem %s173, 64 [#allocation4]
        %v581 = vld [vmem:[%s580] sm:$0xff]
        %v582 = vld [vmem:[%s580 + $0x8] sm:$0xff]
        %v583 = vld [vmem:[%s580 + $0x10] sm:$0xff]
        %v584 = vld [vmem:[%s580 + $0x18] sm:$0xff]
        %585 = vmatpush.msra.mxu0 %v268
        %586 = vmatpush.msra.mxu0 %v264
        %587 = vmatpush.msra.mxu0 %v260
        %588 = vmatpush.msra.mxu0 %v256
        %589 = vmatpush.msra.mxu0 %v252
        %590 = vmatpush.msra.mxu0 %v248
        %591 = vmatpush.msra.mxu0 %v244
        %592 = vmatpush.msra.mxu0 %v240
        %593 = vmatpush.msra.mxu0 %v236
        %594 = vmatpush.msra.mxu0 %v232
        %595 = vmatpush.msra.mxu0 %v228
        %596 = vmatpush.msra.mxu0 %v224
        %597 = vmatpush.msra.mxu0 %v220
        %598 = vmatpush.msra.mxu0 %v216
        %599 = vmatpush.msra.mxu0 %v212
        %600 = vmatpush.msra.mxu0 %v208
        %601 = vmatmul.f32.gmra.mxu0 %v577
        %v602 = vpop.f32.mrf.mxu0
        %v603 = vadd.f32 0.0, %v602
        %604 = vdwg.mxu0
        %605 = vmatpush.msra.mxu0 %v269
        %606 = vmatpush.msra.mxu0 %v265
        %607 = vmatpush.msra.mxu0 %v261
        %608 = vmatpush.msra.mxu0 %v257
        %609 = vmatpush.msra.mxu0 %v253
        %610 = vmatpush.msra.mxu0 %v249
        %611 = vmatpush.msra.mxu0 %v245
        %612 = vmatpush.msra.mxu0 %v241
        %613 = vmatpush.msra.mxu0 %v237
        %614 = vmatpush.msra.mxu0 %v233
        %615 = vmatpush.msra.mxu0 %v229
        %616 = vmatpush.msra.mxu0 %v225
        %617 = vmatpush.msra.mxu0 %v221
        %618 = vmatpush.msra.mxu0 %v217
        %619 = vmatpush.msra.mxu0 %v213
        %620 = vmatpush.msra.mxu0 %v209
        %621 = vmatmul.f32.gmra.mxu0 %v577
        %v622 = vpop.f32.mrf.mxu0
        %v623 = vadd.f32 0.0, %v622
        %624 = vdwg.mxu0
        %625 = vmatpush.msra.mxu0 %v270
        %626 = vmatpush.msra.mxu0 %v266
        %627 = vmatpush.msra.mxu0 %v262
        %628 = vmatpush.msra.mxu0 %v258
        %629 = vmatpush.msra.mxu0 %v254
        %630 = vmatpush.msra.mxu0 %v250
        %631 = vmatpush.msra.mxu0 %v246
        %632 = vmatpush.msra.mxu0 %v242
        %633 = vmatpush.msra.mxu0 %v238
        %634 = vmatpush.msra.mxu0 %v234
        %635 = vmatpush.msra.mxu0 %v230
        %636 = vmatpush.msra.mxu0 %v226
        %637 = vmatpush.msra.mxu0 %v222
        %638 = vmatpush.msra.mxu0 %v218
        %639 = vmatpush.msra.mxu0 %v214
        %640 = vmatpush.msra.mxu0 %v210
        %641 = vmatmul.f32.gmra.mxu0 %v577
        %v642 = vpop.f32.mrf.mxu0
        %v643 = vadd.f32 0.0, %v642
        %644 = vdwg.mxu0
        %645 = vmatpush.msra.mxu0 %v271
        %646 = vmatpush.msra.mxu0 %v267
        %647 = vmatpush.msra.mxu0 %v263
        %648 = vmatpush.msra.mxu0 %v259
        %649 = vmatpush.msra.mxu0 %v255
        %650 = vmatpush.msra.mxu0 %v251
        %651 = vmatpush.msra.mxu0 %v247
        %652 = vmatpush.msra.mxu0 %v243
        %653 = vmatpush.msra.mxu0 %v239
        %654 = vmatpush.msra.mxu0 %v235
        %655 = vmatpush.msra.mxu0 %v231
        %656 = vmatpush.msra.mxu0 %v227
        %657 = vmatpush.msra.mxu0 %v223
        %658 = vmatpush.msra.mxu0 %v219
        %659 = vmatpush.msra.mxu0 %v215
        %660 = vmatpush.msra.mxu0 %v211
        %661 = vmatmul.f32.gmra.mxu0 %v577
        %v662 = vpop.f32.mrf.mxu0
        %v663 = vadd.f32 0.0, %v662
        %664 = vdwg.mxu0
        %v665 = vadd.f32 %v581, %v603
        %v666 = vadd.f32 %v582, %v623
        %v667 = vadd.f32 %v583, %v643
        %v668 = vadd.f32 %v584, %v663
        %v669 = vxor.u32 %v665, 2147483648
        %v670 = vmul.f32 %v669, 1.442695
        %v671 = vpow.pop %v670
        %v672 = vadd.f32 %v671, 1.0
        %v673 = vrcp.pop %v672
        %v674 = vmul.f32 %v672, %v673
        %v675 = vsub.f32 1.0, %v674
        %v676 = vmul.f32 %v673, %v675
        %v677 = vadd.f32 %v673, %v676
        %vm678 = vweird.f32 %v672
        %vm679 = vweird.f32 %v673
        %vm680 = vmor %vm678, %vm679
        %v681 = vsel %vm680, %v673, %v677
        %v682 = vand.u32 2147483647, %v672
        %vm683 = vcmp.eq.f32.partialorder %v682, 8.507059e+37
        %v684 = vand.u32 %v672, 2147483648
        %v685 = vor.u32 1.1754944e-38, %v684
        %v686 = vsel %vm683, %v685, %v681
        %v687 = vmul.f32 1.0, %v686
        %v688 = vxor.u32 %v666, 2147483648
        %v689 = vmul.f32 %v688, 1.442695
        %v690 = vpow.pop %v689
        %v691 = vadd.f32 %v690, 1.0
        %v692 = vrcp.pop %v691
        %v693 = vmul.f32 %v691, %v692
        %v694 = vsub.f32 1.0, %v693
        %v695 = vmul.f32 %v692, %v694
        %v696 = vadd.f32 %v692, %v695
        %vm697 = vweird.f32 %v691
        %vm698 = vweird.f32 %v692
        %vm699 = vmor %vm697, %vm698
        %v700 = vsel %vm699, %v692, %v696
        %v701 = vand.u32 2147483647, %v691
        %vm702 = vcmp.eq.f32.partialorder %v701, 8.507059e+37
        %v703 = vand.u32 %v691, 2147483648
        %v704 = vor.u32 1.1754944e-38, %v703
        %v705 = vsel %vm702, %v704, %v700
        %v706 = vmul.f32 1.0, %v705
        %v707 = vtanh.pop %v667
        %v708 = vxor.u32 %v668, 2147483648
        %v709 = vmul.f32 %v708, 1.442695
        %v710 = vpow.pop %v709
        %v711 = vadd.f32 %v710, 1.0
        %v712 = vrcp.pop %v711
        %v713 = vmul.f32 %v711, %v712
        %v714 = vsub.f32 1.0, %v713
        %v715 = vmul.f32 %v712, %v714
        %v716 = vadd.f32 %v712, %v715
        %vm717 = vweird.f32 %v711
        %vm718 = vweird.f32 %v712
        %vm719 = vmor %vm717, %vm718
        %v720 = vsel %vm719, %v712, %v716
        %v721 = vand.u32 2147483647, %v711
        %vm722 = vcmp.eq.f32.partialorder %v721, 8.507059e+37
        %v723 = vand.u32 %v711, 2147483648
        %v724 = vor.u32 1.1754944e-38, %v723
        %v725 = vsel %vm722, %v724, %v720
        %v726 = vmul.f32 1.0, %v725
        %v727 = vmul.f32 %v706, %v575
        %v728 = vmul.f32 %v687, %v707
        %v729 = vadd.f32 %v727, %v728
        %v730 = vtanh.pop %v729
        %v731 = vmul.f32 %v726, %v730
        %s732 = scalar_lea.vmem %s199, 16 [#allocation9]
        %733 = vst [vmem:[%s732] sm:$0xff] %v731
        %s734 = scalar_lea.vmem %s173, 96 [#allocation4]
        %v735 = vld [vmem:[%s734] sm:$0xff]
        %v736 = vld [vmem:[%s734 + $0x8] sm:$0xff]
        %v737 = vld [vmem:[%s734 + $0x10] sm:$0xff]
        %v738 = vld [vmem:[%s734 + $0x18] sm:$0xff]
        %739 = vmatpush.msra.mxu0 %v268
        %740 = vmatpush.msra.mxu0 %v264
        %741 = vmatpush.msra.mxu0 %v260
        %742 = vmatpush.msra.mxu0 %v256
        %743 = vmatpush.msra.mxu0 %v252
        %744 = vmatpush.msra.mxu0 %v248
        %745 = vmatpush.msra.mxu0 %v244
        %746 = vmatpush.msra.mxu0 %v240
        %747 = vmatpush.msra.mxu0 %v236
        %748 = vmatpush.msra.mxu0 %v232
        %749 = vmatpush.msra.mxu0 %v228
        %750 = vmatpush.msra.mxu0 %v224
        %751 = vmatpush.msra.mxu0 %v220
        %752 = vmatpush.msra.mxu0 %v216
        %753 = vmatpush.msra.mxu0 %v212
        %754 = vmatpush.msra.mxu0 %v208
        %755 = vmatmul.f32.gmra.mxu0 %v731
        %v756 = vpop.f32.mrf.mxu0
        %v757 = vadd.f32 0.0, %v756
        %758 = vdwg.mxu0
        %759 = vmatpush.msra.mxu0 %v269
        %760 = vmatpush.msra.mxu0 %v265
        %761 = vmatpush.msra.mxu0 %v261
        %762 = vmatpush.msra.mxu0 %v257
        %763 = vmatpush.msra.mxu0 %v253
        %764 = vmatpush.msra.mxu0 %v249
        %765 = vmatpush.msra.mxu0 %v245
        %766 = vmatpush.msra.mxu0 %v241
        %767 = vmatpush.msra.mxu0 %v237
        %768 = vmatpush.msra.mxu0 %v233
        %769 = vmatpush.msra.mxu0 %v229
        %770 = vmatpush.msra.mxu0 %v225
        %771 = vmatpush.msra.mxu0 %v221
        %772 = vmatpush.msra.mxu0 %v217
        %773 = vmatpush.msra.mxu0 %v213
        %774 = vmatpush.msra.mxu0 %v209
        %775 = vmatmul.f32.gmra.mxu0 %v731
        %v776 = vpop.f32.mrf.mxu0
        %v777 = vadd.f32 0.0, %v776
        %778 = vdwg.mxu0
        %779 = vmatpush.msra.mxu0 %v270
        %780 = vmatpush.msra.mxu0 %v266
        %781 = vmatpush.msra.mxu0 %v262
        %782 = vmatpush.msra.mxu0 %v258
        %783 = vmatpush.msra.mxu0 %v254
        %784 = vmatpush.msra.mxu0 %v250
        %785 = vmatpush.msra.mxu0 %v246
        %786 = vmatpush.msra.mxu0 %v242
        %787 = vmatpush.msra.mxu0 %v238
        %788 = vmatpush.msra.mxu0 %v234
        %789 = vmatpush.msra.mxu0 %v230
        %790 = vmatpush.msra.mxu0 %v226
        %791 = vmatpush.msra.mxu0 %v222
        %792 = vmatpush.msra.mxu0 %v218
        %793 = vmatpush.msra.mxu0 %v214
        %794 = vmatpush.msra.mxu0 %v210
        %795 = vmatmul.f32.gmra.mxu0 %v731
        %v796 = vpop.f32.mrf.mxu0
        %v797 = vadd.f32 0.0, %v796
        %798 = vdwg.mxu0
        %799 = vmatpush.msra.mxu0 %v271
        %800 = vmatpush.msra.mxu0 %v267
        %801 = vmatpush.msra.mxu0 %v263
        %802 = vmatpush.msra.mxu0 %v259
        %803 = vmatpush.msra.mxu0 %v255
        %804 = vmatpush.msra.mxu0 %v251
        %805 = vmatpush.msra.mxu0 %v247
        %806 = vmatpush.msra.mxu0 %v243
        %807 = vmatpush.msra.mxu0 %v239
        %808 = vmatpush.msra.mxu0 %v235
        %809 = vmatpush.msra.mxu0 %v231
        %810 = vmatpush.msra.mxu0 %v227
        %811 = vmatpush.msra.mxu0 %v223
        %812 = vmatpush.msra.mxu0 %v219
        %813 = vmatpush.msra.mxu0 %v215
        %814 = vmatpush.msra.mxu0 %v211
        %815 = vmatmul.f32.gmra.mxu0 %v731
        %v816 = vpop.f32.mrf.mxu0
        %v817 = vadd.f32 0.0, %v816
        %818 = vdwg.mxu0
        %v819 = vadd.f32 %v735, %v757
        %v820 = vadd.f32 %v736, %v777
        %v821 = vadd.f32 %v737, %v797
        %v822 = vadd.f32 %v738, %v817
        %v823 = vxor.u32 %v819, 2147483648
        %v824 = vmul.f32 %v823, 1.442695
        %v825 = vpow.pop %v824
        %v826 = vadd.f32 %v825, 1.0
        %v827 = vrcp.pop %v826
        %v828 = vmul.f32 %v826, %v827
        %v829 = vsub.f32 1.0, %v828
        %v830 = vmul.f32 %v827, %v829
        %v831 = vadd.f32 %v827, %v830
        %vm832 = vweird.f32 %v826
        %vm833 = vweird.f32 %v827
        %vm834 = vmor %vm832, %vm833
        %v835 = vsel %vm834, %v827, %v831
        %v836 = vand.u32 2147483647, %v826
        %vm837 = vcmp.eq.f32.partialorder %v836, 8.507059e+37
        %v838 = vand.u32 %v826, 2147483648
        %v839 = vor.u32 1.1754944e-38, %v838
        %v840 = vsel %vm837, %v839, %v835
        %v841 = vmul.f32 1.0, %v840
        %v842 = vxor.u32 %v820, 2147483648
        %v843 = vmul.f32 %v842, 1.442695
        %v844 = vpow.pop %v843
        %v845 = vadd.f32 %v844, 1.0
        %v846 = vrcp.pop %v845
        %v847 = vmul.f32 %v845, %v846
        %v848 = vsub.f32 1.0, %v847
        %v849 = vmul.f32 %v846, %v848
        %v850 = vadd.f32 %v846, %v849
        %vm851 = vweird.f32 %v845
        %vm852 = vweird.f32 %v846
        %vm853 = vmor %vm851, %vm852
        %v854 = vsel %vm853, %v846, %v850
        %v855 = vand.u32 2147483647, %v845
        %vm856 = vcmp.eq.f32.partialorder %v855, 8.507059e+37
        %v857 = vand.u32 %v845, 2147483648
        %v858 = vor.u32 1.1754944e-38, %v857
        %v859 = vsel %vm856, %v858, %v854
        %v860 = vmul.f32 1.0, %v859
        %v861 = vtanh.pop %v821
        %v862 = vxor.u32 %v822, 2147483648
        %v863 = vmul.f32 %v862, 1.442695
        %v864 = vpow.pop %v863
        %v865 = vadd.f32 %v864, 1.0
        %v866 = vrcp.pop %v865
        %v867 = vmul.f32 %v865, %v866
        %v868 = vsub.f32 1.0, %v867
        %v869 = vmul.f32 %v866, %v868
        %v870 = vadd.f32 %v866, %v869
        %vm871 = vweird.f32 %v865
        %vm872 = vweird.f32 %v866
        %vm873 = vmor %vm871, %vm872
        %v874 = vsel %vm873, %v866, %v870
        %v875 = vand.u32 2147483647, %v865
        %vm876 = vcmp.eq.f32.partialorder %v875, 8.507059e+37
        %v877 = vand.u32 %v865, 2147483648
        %v878 = vor.u32 1.1754944e-38, %v877
        %v879 = vsel %vm876, %v878, %v874
        %v880 = vmul.f32 1.0, %v879
        %v881 = vmul.f32 %v860, %v729
        %v882 = vmul.f32 %v841, %v861
        %v883 = vadd.f32 %v881, %v882
        %v884 = vtanh.pop %v883
        %v885 = vmul.f32 %v880, %v884
        %s886 = scalar_lea.vmem %s199, 24 [#allocation9]
        %887 = vst [vmem:[%s886] sm:$0xff] %v885
        %888 = vst [vmem:[#allocation2] sm:$0xff] %v885
        %889 = vst [vmem:[#allocation3] sm:$0xff] %v883
        %s890 = sand.u32 %s91, 1
        %s891 = scalar_lea.sflag [#allocation6], %s890
        %s892 = sand.u32 %s91, 1
        %s893 = smul.addr %s892, 32
        %s894 = scalar_lea.vmem [#allocation9], %s893
        // Predicated region
        $region41: #{tpu_custom_call.1} parent=27 // pred_check
          %p895 = pneg %p101
        $region42: #{tpu_custom_call.1} parent=27 // pred_check_branch
          %897 = sbr.rel (%p895) target = $region44
        $region43: #{tpu_custom_call.1} parent=27 // pred_region
          %s898 = smul.u32 4, %s25
          %900 = vsyncadd %s891, 0
          %s901 = sadd.s32 %s24, %s898
          %s902 = smul.addr %s901, 8
          %s903 = scalar_lea.hbm %s2, %s902
          %s904 = sshll.u32 %s894, 4
          %s905 = int_to_ptr.vmem [resolvable:$true] %s904
          %s906 = sshll.u32 %s903, 4
          %s907 = int_to_ptr.hbm [resolvable:$true] %s906
          %912 = dma.vmem_to_hbm [thread:$0]  %s905, 512, %s907, %s891, 128, 128, 8
        $region44: #{tpu_custom_call.1} parent=27 // pred_fallthru
          _
      $region28: #{tpu_custom_call.1} parent=5 // pred_fallthru
        _
      %p913 = scmp.le.s32.totalorder 2, %s15
      // Predicated region
      $region45: #{tpu_custom_call.1} parent=5 // pred_check
        %p914 = pneg %p913
      $region46: #{tpu_custom_call.1} parent=5 // pred_check_branch
        %916 = sbr.rel (%p914) target = $region48
      $region47: #{tpu_custom_call.1} parent=5 // pred_region
        %s917 = ssub.s32 %s15, 2
        // Predicated region
        $region49: #{tpu_custom_call.1} parent=47 // pred_check
          %p918 = pneg %p107
        $region50: #{tpu_custom_call.1} parent=47 // pred_check_branch
          %920 = sbr.rel (%p918) target = $region52
        $region51: #{tpu_custom_call.1} parent=47 // pred_region
          %s921 = sand.u32 %s92, 1
          %s922 = scalar_lea.sflag [#allocation6], %s921
          %s923 = sand.u32 %s92, 1
          %s924 = smul.addr %s923, 32
          %s925 = scalar_lea.vmem [#allocation9], %s924
          %927 = dma.done %s922, 512
        $region52: #{tpu_custom_call.1} parent=47 // pred_fallthru
          _
      $region48: #{tpu_custom_call.1} parent=5 // pred_fallthru
        _
    $region6: #{tpu_custom_call.1} parent=1 // loop_footer
      %s19 = sadd.s32 1, %s15
    $region7: #{tpu_custom_call.1} parent=1 // loop_footer_branch
      %14 = sbr.rel target = $region3
    $region8: #{tpu_custom_call.1} parent=1 // loop_exit
      _
    %928 = vsyncpa [#allocation5], 1
    %s929 = scalar_lea.sflag [#allocation5], 1
    %930 = vsyncpa %s929, 1
    %931 = vsyncpa [#allocation8], 1
    %932 = vsyncpa [#allocation6], 1
    %s933 = scalar_lea.sflag [#allocation6], 1
    %934 = vsyncpa %s933, 1

</llo_original>
